<compile_context>
chip_gen: v6e
topology: v6e:2x2x1
jax: 0.10.0
libtpu: 0.0.40
codegen_flags: <defaults>
</compile_context>

<pallas_src>
import functools

import jax
import jax.numpy as jnp
from jax.experimental import pallas as pl
from jax.experimental.pallas import tpu as pltpu

LN_EPS = 1e-5   # PyTorch nn.LayerNorm default
OUT_W = 8       # lanes used for the q output slab (column 0 holds the result)


def _layernorm(x, gamma, beta):
    mu = jnp.mean(x, axis=-1, keepdims=True)
    var = jnp.mean((x - mu) * (x - mu), axis=-1, keepdims=True)
    return (x - mu) * jax.lax.rsqrt(var + LN_EPS) * gamma + beta


def _round_up(x, m):
    return (x + m - 1) // m * m


def critic_kernel(state_ref, action_ref,
                  w1_ref, w2_ref, wa_ref,
                  vecs1_ref, vecs2_ref,
                  out_ref):
    # Static slices of the packed vector parameters (cheap Ref views).
    b1 = vecs1_ref[0:1, :]
    g1 = vecs1_ref[1:2, :]
    be1 = vecs1_ref[2:3, :]

    b2 = vecs2_ref[0:1, :]
    g2 = vecs2_ref[1:2, :]
    be2 = vecs2_ref[2:3, :]
    ba = vecs2_ref[3:4, :]
    wq_row = vecs2_ref[4:5, :]
    bq = vecs2_ref[5:6, 0:1]          # (1, 1)

    # fc1 -> LayerNorm -> ReLU
    x = jnp.dot(state_ref[...], w1_ref[...],
                preferred_element_type=jnp.float32) + b1
    x = _layernorm(x, g1, be1)
    x = jnp.maximum(x, 0.0)

    # fc2 -> LayerNorm  (norm2 applies to the fc2 output only, so the action
    # branch cannot be fused into this matmul without changing semantics).
    x = jnp.dot(x, w2_ref[...],
                preferred_element_type=jnp.float32) + b2
    x = _layernorm(x, g2, be2)

    # action branch
    av = jnp.dot(action_ref[...], wa_ref[...],
                 preferred_element_type=jnp.float32) + ba

    # combine, relu, q head as a VPU multiply + lane reduction (no N=1 matmul)
    sav = jnp.maximum(x + av, 0.0)
    q = jnp.sum(sav * wq_row, axis=-1, keepdims=True) + bq     # (bt, 1)

    # Narrow store: broadcast q across just OUT_W (=8) lanes; column 0 is
    # taken outside the kernel.
    out_ref[...] = jnp.broadcast_to(q, out_ref.shape)


@functools.partial(jax.jit, static_argnames=("batch_tile",))
def critic_forward(state, action, params, *, batch_tile=4096):
    B, input_dims = state.shape
    n_actions = action.shape[1]
    fc1_dims = params["w1"].shape[1]
    fc2_dims = params["w2"].shape[1]

    # Batch tile: forced multiple of 8, capped by batch_tile and by the
    # (rounded) batch size.
    bt = min(batch_tile, _round_up(B, 8))
    bt = max(8, (bt // 8) * 8)
    num_tiles = -(-B // bt)
    # v7x: ensure >= 2 grid tiles (when splittable) so the 'parallel' batch
    # axis spans both TensorCores; harmless on v5e/v6e.
    if num_tiles < 2 and B > 8:
        bt = max(8, _round_up(-(-B // 2), 8))
        num_tiles = -(-B // bt)

    # Pack the small (1, dim) parameters into two stacked arrays.
    vecs1 = jnp.concatenate(
        [params["b1"], params["g1"], params["beta1"]], axis=0)          # (3, fc1)
    wq_row = params["wq"].T                                             # (1, fc2)
    bq_row = jnp.broadcast_to(params["bq"], (1, fc2_dims))              # (1, fc2)
    vecs2 = jnp.concatenate(
        [params["b2"], params["g2"], params["beta2"], params["ba"],
         wq_row, bq_row], axis=0)                                       # (6, fc2)

    out = pl.pallas_call(
        critic_kernel,
        out_shape=jax.ShapeDtypeStruct((B, OUT_W), jnp.float32),
        grid=(num_tiles,),
        in_specs=[
            # Activations: tiled along the batch grid axis; the last block may
            # be partial (Pallas pads reads / masks writebacks).
            pl.BlockSpec((bt, input_dims), lambda i: (i, 0)),
            pl.BlockSpec((bt, n_actions), lambda i: (i, 0)),
            # Weights / packed vectors: constant index_map -> VMEM-resident.
            pl.BlockSpec((input_dims, fc1_dims), lambda i: (0, 0)),
            pl.BlockSpec((fc1_dims, fc2_dims), lambda i: (0, 0)),
            pl.BlockSpec((n_actions, fc2_dims), lambda i: (0, 0)),
            pl.BlockSpec((3, fc1_dims), lambda i: (0, 0)),
            pl.BlockSpec((6, fc2_dims), lambda i: (0, 0)),
        ],
        out_specs=pl.BlockSpec((bt, OUT_W), lambda i: (i, 0)),
        compiler_params=pltpu.CompilerParams(
            dimension_semantics=("parallel",)),
    )(state, action,
      params["w1"], params["w2"], params["wa"],
      vecs1, vecs2)

    return out[:, :1]


def init_params(key, input_dims, fc1_dims, fc2_dims, n_actions):
    """Deterministic init mirroring the PyTorch module's __init__ ranges."""
    ks = jax.random.split(key, 8)
    # NOTE: the original code uses weight.size()[0] == out_features for the bound.
    f1 = 1.0 / jnp.sqrt(fc1_dims)
    f2 = 1.0 / jnp.sqrt(fc2_dims)
    f3 = 0.003
    fa = 1.0 / jnp.sqrt(n_actions)  # PyTorch default Linear init (1/sqrt(fan_in))

    def u(k, shape, bound):
        return jax.random.uniform(k, shape, jnp.float32, -bound, bound)

    return {
        "w1": u(ks[0], (input_dims, fc1_dims), f1),
        "b1": u(ks[1], (1, fc1_dims), f1),
        "g1": jnp.ones((1, fc1_dims), jnp.float32),
        "beta1": jnp.zeros((1, fc1_dims), jnp.float32),
        "w2": u(ks[2], (fc1_dims, fc2_dims), f2),
        "b2": u(ks[3], (1, fc2_dims), f2),
        "g2": jnp.ones((1, fc2_dims), jnp.float32),
        "beta2": jnp.zeros((1, fc2_dims), jnp.float32),
        "wa": u(ks[4], (n_actions, fc2_dims), fa),
        "ba": u(ks[5], (1, fc2_dims), fa),
        "wq": u(ks[6], (fc2_dims, 1), f3),
        "bq": u(ks[7], (1, 1), f3),
    }


def reference_forward(state, action, p):
    """Pure-JAX reference (mirrors the PyTorch forward)."""
    x = state @ p["w1"] + p["b1"]
    x = _layernorm(x, p["g1"], p["beta1"])
    x = jax.nn.relu(x)
    x = x @ p["w2"] + p["b2"]
    x = _layernorm(x, p["g2"], p["beta2"])
    av = action @ p["wa"] + p["ba"]
    sav = jax.nn.relu(x + av)
    return sav @ p["wq"] + p["bq"]


if __name__ == "__main__":
    key = jax.random.PRNGKey(0)
    k_param, k_state, k_action, k_state2, k_action2 = jax.random.split(key, 5)

    input_dims = 16
    fc1_dims = 64
    fc2_dims = 32
    n_actions = 4
    params = init_params(k_param, input_dims, fc1_dims, fc2_dims, n_actions)

    # Small batch (single grid step, full output block).
    batch = 8
    state = jax.random.normal(k_state, (batch, input_dims), jnp.float32)
    action = jax.random.normal(k_action, (batch, n_actions), jnp.float32)
    q = jax.block_until_ready(critic_forward(state, action, params))
    q_ref = reference_forward(state, action, params)
    assert q.shape == (batch, 1)
    assert jnp.allclose(q, q_ref, atol=1e-5, rtol=1e-5), "mismatch vs reference (B=8)"

    # Larger, ragged batch exercising multiple grid steps + a partial last block.
    batch2 = 300
    state2 = jax.random.normal(k_state2, (batch2, input_dims), jnp.float32)
    action2 = jax.random.normal(k_action2, (batch2, n_actions), jnp.float32)
    q2 = jax.block_until_ready(
        critic_forward(state2, action2, params, batch_tile=128))
    q2_ref = reference_forward(state2, action2, params)
    assert q2.shape == (batch2, 1)
    assert jnp.allclose(q2, q2_ref, atol=1e-5, rtol=1e-5), "mismatch vs reference (B=300)"

    print("KERNEL_OK")
</pallas_src>

<mosaic_0001>
module attributes {stable_mosaic.version = 11 : i64} {
  func.func @critic_kernel(%arg0: i32, %arg1: memref<8x16xf32, #tpu.memory_space<vmem>>, %arg2: memref<8x4xf32, #tpu.memory_space<vmem>>, %arg3: memref<16x64xf32, #tpu.memory_space<vmem>>, %arg4: memref<64x32xf32, #tpu.memory_space<vmem>>, %arg5: memref<4x32xf32, #tpu.memory_space<vmem>>, %arg6: memref<3x64xf32, #tpu.memory_space<vmem>>, %arg7: memref<6x32xf32, #tpu.memory_space<vmem>>, %arg8: memref<8x8xf32, #tpu.memory_space<vmem>>) attributes {dimension_semantics = [#tpu.dimension_semantics<parallel>], iteration_bounds = array<i64: 1>, scalar_prefetch = 0 : i64, scratch_operands = 0 : i64, tpu.core_type = #tpu.core_type<tc>, window_params = [{transform_indices = @transform_0, window_bounds = array<i64: 8, 16>}, {transform_indices = @transform_1, window_bounds = array<i64: 8, 4>}, {pipeline_mode = #tpu.pipeline_mode<synchronous>, transform_indices = @transform_2, window_bounds = array<i64: 16, 64>}, {pipeline_mode = #tpu.pipeline_mode<synchronous>, transform_indices = @transform_3, window_bounds = array<i64: 64, 32>}, {pipeline_mode = #tpu.pipeline_mode<synchronous>, transform_indices = @transform_4, window_bounds = array<i64: 4, 32>}, {pipeline_mode = #tpu.pipeline_mode<synchronous>, transform_indices = @transform_5, window_bounds = array<i64: 3, 64>}, {pipeline_mode = #tpu.pipeline_mode<synchronous>, transform_indices = @transform_6, window_bounds = array<i64: 6, 32>}, {transform_indices = @transform_7, window_bounds = array<i64: 8, 8>}]} {
    %c0 = arith.constant 0 : index
    %c0_0 = arith.constant 0 : index
    %0 = vector.load %arg6[%c0, %c0_0] : memref<3x64xf32, #tpu.memory_space<vmem>>, vector<1x64xf32>
    %c1 = arith.constant 1 : index
    %c0_1 = arith.constant 0 : index
    %1 = vector.load %arg6[%c1, %c0_1] : memref<3x64xf32, #tpu.memory_space<vmem>>, vector<1x64xf32>
    %c2 = arith.constant 2 : index
    %c0_2 = arith.constant 0 : index
    %2 = vector.load %arg6[%c2, %c0_2] : memref<3x64xf32, #tpu.memory_space<vmem>>, vector<1x64xf32>
    %c0_3 = arith.constant 0 : index
    %c0_4 = arith.constant 0 : index
    %3 = vector.load %arg7[%c0_3, %c0_4] : memref<6x32xf32, #tpu.memory_space<vmem>>, vector<1x32xf32>
    %c1_5 = arith.constant 1 : index
    %c0_6 = arith.constant 0 : index
    %4 = vector.load %arg7[%c1_5, %c0_6] : memref<6x32xf32, #tpu.memory_space<vmem>>, vector<1x32xf32>
    %c2_7 = arith.constant 2 : index
    %c0_8 = arith.constant 0 : index
    %5 = vector.load %arg7[%c2_7, %c0_8] : memref<6x32xf32, #tpu.memory_space<vmem>>, vector<1x32xf32>
    %c3 = arith.constant 3 : index
    %c0_9 = arith.constant 0 : index
    %6 = vector.load %arg7[%c3, %c0_9] : memref<6x32xf32, #tpu.memory_space<vmem>>, vector<1x32xf32>
    %c4 = arith.constant 4 : index
    %c0_10 = arith.constant 0 : index
    %7 = vector.load %arg7[%c4, %c0_10] : memref<6x32xf32, #tpu.memory_space<vmem>>, vector<1x32xf32>
    %c5 = arith.constant 5 : index
    %c0_11 = arith.constant 0 : index
    %8 = vector.load %arg7[%c5, %c0_11] : memref<6x32xf32, #tpu.memory_space<vmem>>, vector<1x1xf32>
    %c0_12 = arith.constant 0 : index
    %c0_13 = arith.constant 0 : index
    %9 = vector.load %arg1[%c0_12, %c0_13] : memref<8x16xf32, #tpu.memory_space<vmem>>, vector<8x16xf32>
    %c0_14 = arith.constant 0 : index
    %c0_15 = arith.constant 0 : index
    %10 = vector.load %arg3[%c0_14, %c0_15] : memref<16x64xf32, #tpu.memory_space<vmem>>, vector<16x64xf32>
    %cst = arith.constant dense<0.000000e+00> : vector<8x64xf32>
    %11 = tpu.matmul %9, %10, %cst {dimension_numbers = #tpu.dot_dimension_numbers<[1], [0], [0], [1], [0, 0, 1, 1], [], []>} : vector<8x16xf32>, vector<16x64xf32>, vector<8x64xf32> -> vector<8x64xf32>
    %12 = vector.broadcast %0 : vector<1x64xf32> to vector<8x64xf32>
    %13 = arith.addf %11, %12 : vector<8x64xf32>
    %cst_16 = arith.constant dense<0.000000e+00> : vector<8xf32>
    %14 = vector.multi_reduction <add>, %13, %cst_16 [1] : vector<8x64xf32> to vector<8xf32>
    %15 = vector.shape_cast %14 : vector<8xf32> to vector<8x1xf32>
    %cst_17 = arith.constant 6.400000e+01 : f32
    %16 = vector.broadcast %cst_17 : f32 to vector<8x1xf32>
    %17 = arith.divf %15, %16 : vector<8x1xf32>
    %18 = vector.broadcast %17 : vector<8x1xf32> to vector<8x64xf32>
    %19 = arith.subf %13, %18 : vector<8x64xf32>
    %20 = vector.broadcast %17 : vector<8x1xf32> to vector<8x64xf32>
    %21 = arith.subf %13, %20 : vector<8x64xf32>
    %22 = arith.mulf %19, %21 : vector<8x64xf32>
    %cst_18 = arith.constant dense<0.000000e+00> : vector<8xf32>
    %23 = vector.multi_reduction <add>, %22, %cst_18 [1] : vector<8x64xf32> to vector<8xf32>
    %24 = vector.shape_cast %23 : vector<8xf32> to vector<8x1xf32>
    %cst_19 = arith.constant 6.400000e+01 : f32
    %25 = vector.broadcast %cst_19 : f32 to vector<8x1xf32>
    %26 = arith.divf %24, %25 : vector<8x1xf32>
    %27 = vector.broadcast %17 : vector<8x1xf32> to vector<8x64xf32>
    %28 = arith.subf %13, %27 : vector<8x64xf32>
    %cst_20 = arith.constant 9.99999974E-6 : f32
    %29 = vector.broadcast %cst_20 : f32 to vector<8x1xf32>
    %30 = arith.addf %26, %29 : vector<8x1xf32>
    %31 = math.rsqrt %30 : vector<8x1xf32>
    %32 = vector.broadcast %31 : vector<8x1xf32> to vector<8x64xf32>
    %33 = arith.mulf %28, %32 : vector<8x64xf32>
    %34 = vector.broadcast %1 : vector<1x64xf32> to vector<8x64xf32>
    %35 = arith.mulf %33, %34 : vector<8x64xf32>
    %36 = vector.broadcast %2 : vector<1x64xf32> to vector<8x64xf32>
    %37 = arith.addf %35, %36 : vector<8x64xf32>
    %cst_21 = arith.constant 0.000000e+00 : f32
    %38 = vector.broadcast %cst_21 : f32 to vector<8x64xf32>
    %39 = arith.maximumf %37, %38 : vector<8x64xf32>
    %c0_22 = arith.constant 0 : index
    %c0_23 = arith.constant 0 : index
    %40 = vector.load %arg4[%c0_22, %c0_23] : memref<64x32xf32, #tpu.memory_space<vmem>>, vector<64x32xf32>
    %cst_24 = arith.constant dense<0.000000e+00> : vector<8x32xf32>
    %41 = tpu.matmul %39, %40, %cst_24 {dimension_numbers = #tpu.dot_dimension_numbers<[1], [0], [0], [1], [0, 0, 1, 1], [], []>} : vector<8x64xf32>, vector<64x32xf32>, vector<8x32xf32> -> vector<8x32xf32>
    %42 = vector.broadcast %3 : vector<1x32xf32> to vector<8x32xf32>
    %43 = arith.addf %41, %42 : vector<8x32xf32>
    %cst_25 = arith.constant dense<0.000000e+00> : vector<8xf32>
    %44 = vector.multi_reduction <add>, %43, %cst_25 [1] : vector<8x32xf32> to vector<8xf32>
    %45 = vector.shape_cast %44 : vector<8xf32> to vector<8x1xf32>
    %cst_26 = arith.constant 3.200000e+01 : f32
    %46 = vector.broadcast %cst_26 : f32 to vector<8x1xf32>
    %47 = arith.divf %45, %46 : vector<8x1xf32>
    %48 = vector.broadcast %47 : vector<8x1xf32> to vector<8x32xf32>
    %49 = arith.subf %43, %48 : vector<8x32xf32>
    %50 = vector.broadcast %47 : vector<8x1xf32> to vector<8x32xf32>
    %51 = arith.subf %43, %50 : vector<8x32xf32>
    %52 = arith.mulf %49, %51 : vector<8x32xf32>
    %cst_27 = arith.constant dense<0.000000e+00> : vector<8xf32>
    %53 = vector.multi_reduction <add>, %52, %cst_27 [1] : vector<8x32xf32> to vector<8xf32>
    %54 = vector.shape_cast %53 : vector<8xf32> to vector<8x1xf32>
    %cst_28 = arith.constant 3.200000e+01 : f32
    %55 = vector.broadcast %cst_28 : f32 to vector<8x1xf32>
    %56 = arith.divf %54, %55 : vector<8x1xf32>
    %57 = vector.broadcast %47 : vector<8x1xf32> to vector<8x32xf32>
    %58 = arith.subf %43, %57 : vector<8x32xf32>
    %cst_29 = arith.constant 9.99999974E-6 : f32
    %59 = vector.broadcast %cst_29 : f32 to vector<8x1xf32>
    %60 = arith.addf %56, %59 : vector<8x1xf32>
    %61 = math.rsqrt %60 : vector<8x1xf32>
    %62 = vector.broadcast %61 : vector<8x1xf32> to vector<8x32xf32>
    %63 = arith.mulf %58, %62 : vector<8x32xf32>
    %64 = vector.broadcast %4 : vector<1x32xf32> to vector<8x32xf32>
    %65 = arith.mulf %63, %64 : vector<8x32xf32>
    %66 = vector.broadcast %5 : vector<1x32xf32> to vector<8x32xf32>
    %67 = arith.addf %65, %66 : vector<8x32xf32>
    %c0_30 = arith.constant 0 : index
    %c0_31 = arith.constant 0 : index
    %68 = vector.load %arg2[%c0_30, %c0_31] : memref<8x4xf32, #tpu.memory_space<vmem>>, vector<8x4xf32>
    %c0_32 = arith.constant 0 : index
    %c0_33 = arith.constant 0 : index
    %69 = vector.load %arg5[%c0_32, %c0_33] : memref<4x32xf32, #tpu.memory_space<vmem>>, vector<4x32xf32>
    %cst_34 = arith.constant dense<0.000000e+00> : vector<8x32xf32>
    %70 = tpu.matmul %68, %69, %cst_34 {dimension_numbers = #tpu.dot_dimension_numbers<[1], [0], [0], [1], [0, 0, 1, 1], [], []>} : vector<8x4xf32>, vector<4x32xf32>, vector<8x32xf32> -> vector<8x32xf32>
    %71 = vector.broadcast %6 : vector<1x32xf32> to vector<8x32xf32>
    %72 = arith.addf %70, %71 : vector<8x32xf32>
    %73 = arith.addf %67, %72 : vector<8x32xf32>
    %cst_35 = arith.constant 0.000000e+00 : f32
    %74 = vector.broadcast %cst_35 : f32 to vector<8x32xf32>
    %75 = arith.maximumf %73, %74 : vector<8x32xf32>
    %76 = vector.broadcast %7 : vector<1x32xf32> to vector<8x32xf32>
    %77 = arith.mulf %75, %76 : vector<8x32xf32>
    %cst_36 = arith.constant dense<0.000000e+00> : vector<8xf32>
    %78 = vector.multi_reduction <add>, %77, %cst_36 [1] : vector<8x32xf32> to vector<8xf32>
    %79 = vector.shape_cast %78 : vector<8xf32> to vector<8x1xf32>
    %80 = vector.broadcast %8 : vector<1x1xf32> to vector<8x1xf32>
    %81 = arith.addf %79, %80 : vector<8x1xf32>
    %82 = vector.shape_cast %81 : vector<8x1xf32> to vector<8x1xf32>
    %83 = vector.broadcast %82 : vector<8x1xf32> to vector<8x8xf32>
    %c0_37 = arith.constant 0 : index
    %c0_38 = arith.constant 0 : index
    %84 = vector.load %arg8[%c0_37, %c0_38] : memref<8x8xf32, #tpu.memory_space<vmem>>, vector<8x8xf32>
    tpu.vector_store %arg8[%c0_37, %c0_38], %83 {strides = array<i32>} : memref<8x8xf32, #tpu.memory_space<vmem>>, vector<8x8xf32>,
    return
  }
  func.func @transform_0(%arg0: i32) -> (i32, i32) {
    %c0_i32 = arith.constant 0 : i32
    %c0_i32_0 = arith.constant 0 : i32
    return %arg0, %c0_i32 : i32, i32
  }
  func.func @transform_1(%arg0: i32) -> (i32, i32) {
    %c0_i32 = arith.constant 0 : i32
    %c0_i32_0 = arith.constant 0 : i32
    return %arg0, %c0_i32 : i32, i32
  }
  func.func @transform_2(%arg0: i32) -> (i32, i32) {
    %c0_i32 = arith.constant 0 : i32
    %c0_i32_0 = arith.constant 0 : i32
    %c0_i32_1 = arith.constant 0 : i32
    return %c0_i32, %c0_i32_0 : i32, i32
  }
  func.func @transform_3(%arg0: i32) -> (i32, i32) {
    %c0_i32 = arith.constant 0 : i32
    %c0_i32_0 = arith.constant 0 : i32
    %c0_i32_1 = arith.constant 0 : i32
    return %c0_i32, %c0_i32_0 : i32, i32
  }
  func.func @transform_4(%arg0: i32) -> (i32, i32) {
    %c0_i32 = arith.constant 0 : i32
    %c0_i32_0 = arith.constant 0 : i32
    %c0_i32_1 = arith.constant 0 : i32
    return %c0_i32, %c0_i32_0 : i32, i32
  }
  func.func @transform_5(%arg0: i32) -> (i32, i32) {
    %c0_i32 = arith.constant 0 : i32
    %c0_i32_0 = arith.constant 0 : i32
    %c0_i32_1 = arith.constant 0 : i32
    return %c0_i32, %c0_i32_0 : i32, i32
  }
  func.func @transform_6(%arg0: i32) -> (i32, i32) {
    %c0_i32 = arith.constant 0 : i32
    %c0_i32_0 = arith.constant 0 : i32
    %c0_i32_1 = arith.constant 0 : i32
    return %c0_i32, %c0_i32_0 : i32, i32
  }
  func.func @transform_7(%arg0: i32) -> (i32, i32) {
    %c0_i32 = arith.constant 0 : i32
    %c0_i32_0 = arith.constant 0 : i32
    return %arg0, %c0_i32 : i32, i32
  }
}

</mosaic_0001>

<llo_original>
// kernel: critic_forward.1
$region0: #{critic_forward.1}
  #allocation0 [shape = 'u32[]', space=smem, size = 0x4, offset = 0x4, fixed_abs, tag = 'smem constant byte address 0x4 - core index']
  #allocation1 [shape = 'u32[144,128]{1,0:T(1,128)}', space=vmem, size = 0x12000, scoped, tag = 'internal scratch']
  %s0 = inlined_call_operand.vmem [shape: f32[8,16], index: 0, kind: input, shape index: {}]
  %s1 = inlined_call_operand.vmem [shape: f32[8,4], index: 1, kind: input, shape index: {}]
  %s2 = inlined_call_operand.vmem [shape: f32[16,64], index: 2, kind: input, shape index: {}]
  %s3 = inlined_call_operand.vmem [shape: f32[64,32], index: 3, kind: input, shape index: {}]
  %s4 = inlined_call_operand.vmem [shape: f32[4,32], index: 4, kind: input, shape index: {}]
  %s5 = inlined_call_operand.vmem [shape: f32[3,64], index: 5, kind: input, shape index: {}]
  %s6 = inlined_call_operand.vmem [shape: f32[6,32], index: 6, kind: input, shape index: {}]
  %s7 = inlined_call_operand.vmem [shape: f32[8,8], index: 7, kind: output, shape index: {}]
  %s8 = sld [smem:[#allocation0]]
  $region38: #{critic_forward.1} parent=0
    _
  %s10 = ssub.s32 1, %s8
  %s11 = scalar_select 0, %s10, %s8
  // Predicated region
  $region2: #{critic_forward.1} parent=0 // pred_check
    _
  $region3: #{critic_forward.1} parent=0 // pred_check_branch
    %13 = sbr.rel (0) target = $region5
  $region4: #{critic_forward.1} parent=0 // pred_region
    _
  $region5: #{critic_forward.1} parent=0 // pred_fallthru
    _
  // Predicated region
  $region6: #{critic_forward.1} parent=0 // pred_check
    _
  $region7: #{critic_forward.1} parent=0 // pred_check_branch
    %15 = sbr.rel (0) target = $region9
  $region8: #{critic_forward.1} parent=0 // pred_region
    _
  $region9: #{critic_forward.1} parent=0 // pred_fallthru
    _
  // Predicated region
  $region10: #{critic_forward.1} parent=0 // pred_check
    _
  $region11: #{critic_forward.1} parent=0 // pred_check_branch
    %17 = sbr.rel (0) target = $region13
  $region12: #{critic_forward.1} parent=0 // pred_region
    _
  $region13: #{critic_forward.1} parent=0 // pred_fallthru
    _
  // Predicated region
  $region14: #{critic_forward.1} parent=0 // pred_check
    _
  $region15: #{critic_forward.1} parent=0 // pred_check_branch
    %19 = sbr.rel (0) target = $region17
  $region16: #{critic_forward.1} parent=0 // pred_region
    _
  $region17: #{critic_forward.1} parent=0 // pred_fallthru
    _
  // Predicated region
  $region18: #{critic_forward.1} parent=0 // pred_check
    _
  $region19: #{critic_forward.1} parent=0 // pred_check_branch
    %21 = sbr.rel (0) target = $region21
  $region20: #{critic_forward.1} parent=0 // pred_region
    _
  $region21: #{critic_forward.1} parent=0 // pred_fallthru
    _
  // Predicated region
  $region22: #{critic_forward.1} parent=0 // pred_check
    _
  $region23: #{critic_forward.1} parent=0 // pred_check_branch
    %23 = sbr.rel (0) target = $region25
  $region24: #{critic_forward.1} parent=0 // pred_region
    _
  $region25: #{critic_forward.1} parent=0 // pred_fallthru
    _
  // Predicated region
  $region26: #{critic_forward.1} parent=0 // pred_check
    _
  $region27: #{critic_forward.1} parent=0 // pred_check_branch
    %25 = sbr.rel (0) target = $region29
  $region28: #{critic_forward.1} parent=0 // pred_region
    _
  $region29: #{critic_forward.1} parent=0 // pred_fallthru
    _
  %v26 = vld [vmem:[%s5] sm:$0x1]
  %v27 = vld [vmem:[%s5 + $0x1] sm:$0x1]
  %v28 = vld [vmem:[%s5 + $0x2] sm:$0x1]
  %v29 = vld [vmem:[%s6] sm:$0x1]
  %v30 = vld [vmem:[%s6 + $0x1] sm:$0x1]
  %v31 = vld [vmem:[%s6 + $0x2] sm:$0x1]
  %v32 = vld [vmem:[%s6 + $0x3] sm:$0x1]
  %v33 = vld [vmem:[%s6 + $0x4] sm:$0x1]
  %v34 = vld [vmem:[%s6 + $0x5] sm:$0x1]
  %v35 = vld [vmem:[%s0] sm:$0xff]
  %v36 = vld [vmem:[%s2] sm:$0xff]
  %v37 = vld [vmem:[%s2 + $0x8] sm:$0xff]
  %v38 = vlaneseq
  %v39 = vshrl.u32 %v38, 7
  %v40 = vsub.s32 0, %v39
  %v41 = vrot.slane %v26, %v40
  %vm42 = vcmask 130048
  %v44 = vsel %vm42, %v35, 0
  %46 = vmatprep.subr.mxu0 0.0
  %47 = vmatpush1.msra.mxu0 0.0
  %48 = vmatprep.subr.mxu0 0.0
  %49 = vmatpush1.msra.mxu0 0.0
  %50 = vmatprep.subr.mxu0 0.0
  %51 = vmatpush1.msra.mxu0 0.0
  %52 = vmatprep.subr.mxu0 0.0
  %53 = vmatpush1.msra.mxu0 0.0
  %54 = vmatprep.subr.mxu0 0.0
  %55 = vmatpush1.msra.mxu0 0.0
  %56 = vmatprep.subr.mxu0 0.0
  %57 = vmatpush1.msra.mxu0 0.0
  %58 = vmatprep.subr.mxu0 0.0
  %59 = vmatpush1.msra.mxu0 0.0
  %60 = vmatprep.subr.mxu0 0.0
  %61 = vmatpush1.msra.mxu0 0.0
  %62 = vmatprep.subr.mxu0 0.0
  %63 = vmatpush1.msra.mxu0 0.0
  %64 = vmatprep.subr.mxu0 0.0
  %65 = vmatpush1.msra.mxu0 0.0
  %66 = vmatprep.subr.mxu0 0.0
  %67 = vmatpush1.msra.mxu0 0.0
  %68 = vmatprep.subr.mxu0 0.0
  %69 = vmatpush1.msra.mxu0 0.0
  %70 = vmatprep.subr.mxu0 0.0
  %71 = vmatpush1.msra.mxu0 0.0
  %72 = vmatprep.subr.mxu0 0.0
  %73 = vmatpush1.msra.mxu0 0.0
  %74 = vmatprep.subr.mxu0 0.0
  %75 = vmatpush1.msra.mxu0 %v37
  %76 = vmatprep.subr.mxu0 0.0
  %77 = vmatpush1.msra.mxu0 %v36
  %78 = vmatprep.subr.mxu0 0.0
  %79 = vmatpush2.msra.mxu0 0.0
  %80 = vmatprep.subr.mxu0 0.0
  %81 = vmatpush2.msra.mxu0 0.0
  %82 = vmatprep.subr.mxu0 0.0
  %83 = vmatpush2.msra.mxu0 0.0
  %84 = vmatprep.subr.mxu0 0.0
  %85 = vmatpush2.msra.mxu0 0.0
  %86 = vmatprep.subr.mxu0 0.0
  %87 = vmatpush2.msra.mxu0 0.0
  %88 = vmatprep.subr.mxu0 0.0
  %89 = vmatpush2.msra.mxu0 0.0
  %90 = vmatprep.subr.mxu0 0.0
  %91 = vmatpush2.msra.mxu0 0.0
  %92 = vmatprep.subr.mxu0 0.0
  %93 = vmatpush2.msra.mxu0 0.0
  %94 = vmatprep.subr.mxu0 0.0
  %95 = vmatpush2.msra.mxu0 0.0
  %96 = vmatprep.subr.mxu0 0.0
  %97 = vmatpush2.msra.mxu0 0.0
  %98 = vmatprep.subr.mxu0 0.0
  %99 = vmatpush2.msra.mxu0 0.0
  %100 = vmatprep.subr.mxu0 0.0
  %101 = vmatpush2.msra.mxu0 0.0
  %102 = vmatprep.subr.mxu0 0.0
  %103 = vmatpush2.msra.mxu0 0.0
  %104 = vmatprep.subr.mxu0 0.0
  %105 = vmatpush2.msra.mxu0 0.0
  %106 = vmatprep.subr.mxu0 0.0
  %107 = vmatpush2.msra.mxu0 0.0
  %108 = vmatprep.subr.mxu0 0.0
  %109 = vmatpush2.msra.mxu0 0.0
  %110 = vmatprep.mubr.f32.mxu0 0.0
  %111 = vmatmul.mubr.f32.gmra.mxu0 %v44
  %v112 = vpop.f32.mrf.mxu0
  %v113 = vadd.f32 %v41, %v112
  %v114 = vpop.f32.mrf.mxu0
  %115 = vdwg.mxu0
  %vm116 = vcmask 523264
  %v117 = vsel %vm116, %v113, 0.0
  %118 = vadd.xlane.f32.xlu0 %v117
  %v119 = vpop.xlane.xlu0 %118
  %v120 = vrcp.pop 64.0
  %v121 = vmul.f32 %v119, %v120
  %v122 = vsub.f32 %v113, %v121
  %v123 = vmul.f32 %v122, %v122
  %v124 = vsel %vm116, %v123, 0.0
  %125 = vadd.xlane.f32.xlu0 %v124
  %v126 = vpop.xlane.xlu0 %125
  %v127 = vmul.f32 %v126, %v120
  %v128 = vadd.f32 %v127, 1e-05
  %v129 = vrsqrt.pop %v128
  %v130 = vmul.f32 %v122, %v129
  %v131 = vlaneseq
  %v132 = vshrl.u32 %v131, 7
  %v133 = vsub.s32 0, %v132
  %v134 = vrot.slane %v27, %v133
  %v135 = vmul.f32 %v130, %v134
  %v136 = vlaneseq
  %v137 = vshrl.u32 %v136, 7
  %v138 = vsub.s32 0, %v137
  %v139 = vrot.slane %v28, %v138
  %v140 = vadd.f32 %v135, %v139
  %v141 = vmax.f32 %v140, 0.0
  %v142 = vld [vmem:[%s3] sm:$0xff]
  %v143 = vld [vmem:[%s3 + $0x8] sm:$0xff]
  %v144 = vld [vmem:[%s3 + $0x10] sm:$0xff]
  %v145 = vld [vmem:[%s3 + $0x18] sm:$0xff]
  %v146 = vld [vmem:[%s3 + $0x20] sm:$0xff]
  %v147 = vld [vmem:[%s3 + $0x28] sm:$0xff]
  %v148 = vld [vmem:[%s3 + $0x30] sm:$0xff]
  %v149 = vld [vmem:[%s3 + $0x38] sm:$0xff]
  %v150 = vlaneseq
  %v151 = vshrl.u32 %v150, 7
  %v152 = vsub.s32 0, %v151
  %v153 = vrot.slane %v29, %v152
  %v155 = vsel %vm116, %v141, 0
  %157 = vmatprep.subr.mxu0 0.0
  %158 = vmatpush1.msra.mxu0 0.0
  %159 = vmatprep.subr.mxu0 0.0
  %160 = vmatpush1.msra.mxu0 0.0
  %161 = vmatprep.subr.mxu0 0.0
  %162 = vmatpush1.msra.mxu0 0.0
  %163 = vmatprep.subr.mxu0 0.0
  %164 = vmatpush1.msra.mxu0 0.0
  %165 = vmatprep.subr.mxu0 0.0
  %166 = vmatpush1.msra.mxu0 0.0
  %167 = vmatprep.subr.mxu0 0.0
  %168 = vmatpush1.msra.mxu0 0.0
  %169 = vmatprep.subr.mxu0 0.0
  %170 = vmatpush1.msra.mxu0 0.0
  %171 = vmatprep.subr.mxu0 0.0
  %172 = vmatpush1.msra.mxu0 0.0
  %173 = vmatprep.subr.mxu0 0.0
  %174 = vmatpush1.msra.mxu0 %v149
  %175 = vmatprep.subr.mxu0 0.0
  %176 = vmatpush1.msra.mxu0 %v148
  %177 = vmatprep.subr.mxu0 0.0
  %178 = vmatpush1.msra.mxu0 %v147
  %179 = vmatprep.subr.mxu0 0.0
  %180 = vmatpush1.msra.mxu0 %v146
  %181 = vmatprep.subr.mxu0 0.0
  %182 = vmatpush1.msra.mxu0 %v145
  %183 = vmatprep.subr.mxu0 0.0
  %184 = vmatpush1.msra.mxu0 %v144
  %185 = vmatprep.subr.mxu0 0.0
  %186 = vmatpush1.msra.mxu0 %v143
  %187 = vmatprep.subr.mxu0 0.0
  %188 = vmatpush1.msra.mxu0 %v142
  %189 = vmatprep.subr.mxu0 0.0
  %190 = vmatpush2.msra.mxu0 0.0
  %191 = vmatprep.subr.mxu0 0.0
  %192 = vmatpush2.msra.mxu0 0.0
  %193 = vmatprep.subr.mxu0 0.0
  %194 = vmatpush2.msra.mxu0 0.0
  %195 = vmatprep.subr.mxu0 0.0
  %196 = vmatpush2.msra.mxu0 0.0
  %197 = vmatprep.subr.mxu0 0.0
  %198 = vmatpush2.msra.mxu0 0.0
  %199 = vmatprep.subr.mxu0 0.0
  %200 = vmatpush2.msra.mxu0 0.0
  %201 = vmatprep.subr.mxu0 0.0
  %202 = vmatpush2.msra.mxu0 0.0
  %203 = vmatprep.subr.mxu0 0.0
  %204 = vmatpush2.msra.mxu0 0.0
  %205 = vmatprep.subr.mxu0 0.0
  %206 = vmatpush2.msra.mxu0 0.0
  %207 = vmatprep.subr.mxu0 0.0
  %208 = vmatpush2.msra.mxu0 0.0
  %209 = vmatprep.subr.mxu0 0.0
  %210 = vmatpush2.msra.mxu0 0.0
  %211 = vmatprep.subr.mxu0 0.0
  %212 = vmatpush2.msra.mxu0 0.0
  %213 = vmatprep.subr.mxu0 0.0
  %214 = vmatpush2.msra.mxu0 0.0
  %215 = vmatprep.subr.mxu0 0.0
  %216 = vmatpush2.msra.mxu0 0.0
  %217 = vmatprep.subr.mxu0 0.0
  %218 = vmatpush2.msra.mxu0 0.0
  %219 = vmatprep.subr.mxu0 0.0
  %220 = vmatpush2.msra.mxu0 0.0
  %221 = vmatprep.mubr.f32.mxu0 0.0
  %222 = vmatmul.mubr.f32.gmra.mxu0 %v155
  %v223 = vpop.f32.mrf.mxu0
  %v224 = vadd.f32 %v153, %v223
  %v225 = vpop.f32.mrf.mxu0
  %226 = vdwg.mxu0
  %vm227 = vcmask 261120
  %v228 = vsel %vm227, %v224, 0.0
  %229 = vadd.xlane.f32.xlu0 %v228
  %v230 = vpop.xlane.xlu0 %229
  %v231 = vrcp.pop 32.0
  %v232 = vmul.f32 %v230, %v231
  %v233 = vsub.f32 %v224, %v232
  %v234 = vmul.f32 %v233, %v233
  %v235 = vsel %vm227, %v234, 0.0
  %236 = vadd.xlane.f32.xlu0 %v235
  %v237 = vpop.xlane.xlu0 %236
  %v238 = vmul.f32 %v237, %v231
  %v239 = vadd.f32 %v238, 1e-05
  %v240 = vrsqrt.pop %v239
  %v241 = vmul.f32 %v233, %v240
  %v242 = vlaneseq
  %v243 = vshrl.u32 %v242, 7
  %v244 = vsub.s32 0, %v243
  %v245 = vrot.slane %v30, %v244
  %v246 = vmul.f32 %v241, %v245
  %v247 = vlaneseq
  %v248 = vshrl.u32 %v247, 7
  %v249 = vsub.s32 0, %v248
  %v250 = vrot.slane %v31, %v249
  %v251 = vadd.f32 %v246, %v250
  %v252 = vld [vmem:[%s1] sm:$0xff]
  %v253 = vld [vmem:[%s4] sm:$0xf]
  %v254 = vlaneseq
  %v255 = vshrl.u32 %v254, 7
  %v256 = vsub.s32 0, %v255
  %v257 = vrot.slane %v32, %v256
  %vm258 = vcmask 31744
  %v260 = vsel %vm258, %v252, 0
  %vm262 = vcmask 1043456
  %v264 = vsel %vm262, %v253, 0
  %266 = vmatprep.subr.mxu0 0.0
  %267 = vmatpush1.msra.mxu0 0.0
  %268 = vmatprep.subr.mxu0 0.0
  %269 = vmatpush1.msra.mxu0 0.0
  %270 = vmatprep.subr.mxu0 0.0
  %271 = vmatpush1.msra.mxu0 0.0
  %272 = vmatprep.subr.mxu0 0.0
  %273 = vmatpush1.msra.mxu0 0.0
  %274 = vmatprep.subr.mxu0 0.0
  %275 = vmatpush1.msra.mxu0 0.0
  %276 = vmatprep.subr.mxu0 0.0
  %277 = vmatpush1.msra.mxu0 0.0
  %278 = vmatprep.subr.mxu0 0.0
  %279 = vmatpush1.msra.mxu0 0.0
  %280 = vmatprep.subr.mxu0 0.0
  %281 = vmatpush1.msra.mxu0 0.0
  %282 = vmatprep.subr.mxu0 0.0
  %283 = vmatpush1.msra.mxu0 0.0
  %284 = vmatprep.subr.mxu0 0.0
  %285 = vmatpush1.msra.mxu0 0.0
  %286 = vmatprep.subr.mxu0 0.0
  %287 = vmatpush1.msra.mxu0 0.0
  %288 = vmatprep.subr.mxu0 0.0
  %289 = vmatpush1.msra.mxu0 0.0
  %290 = vmatprep.subr.mxu0 0.0
  %291 = vmatpush1.msra.mxu0 0.0
  %292 = vmatprep.subr.mxu0 0.0
  %293 = vmatpush1.msra.mxu0 0.0
  %294 = vmatprep.subr.mxu0 0.0
  %295 = vmatpush1.msra.mxu0 0.0
  %296 = vmatprep.subr.mxu0 0.0
  %297 = vmatpush1.msra.mxu0 %v264
  %298 = vmatprep.subr.mxu0 0.0
  %299 = vmatpush2.msra.mxu0 0.0
  %300 = vmatprep.subr.mxu0 0.0
  %301 = vmatpush2.msra.mxu0 0.0
  %302 = vmatprep.subr.mxu0 0.0
  %303 = vmatpush2.msra.mxu0 0.0
  %304 = vmatprep.subr.mxu0 0.0
  %305 = vmatpush2.msra.mxu0 0.0
  %306 = vmatprep.subr.mxu0 0.0
  %307 = vmatpush2.msra.mxu0 0.0
  %308 = vmatprep.subr.mxu0 0.0
  %309 = vmatpush2.msra.mxu0 0.0
  %310 = vmatprep.subr.mxu0 0.0
  %311 = vmatpush2.msra.mxu0 0.0
  %312 = vmatprep.subr.mxu0 0.0
  %313 = vmatpush2.msra.mxu0 0.0
  %314 = vmatprep.subr.mxu0 0.0
  %315 = vmatpush2.msra.mxu0 0.0
  %316 = vmatprep.subr.mxu0 0.0
  %317 = vmatpush2.msra.mxu0 0.0
  %318 = vmatprep.subr.mxu0 0.0
  %319 = vmatpush2.msra.mxu0 0.0
  %320 = vmatprep.subr.mxu0 0.0
  %321 = vmatpush2.msra.mxu0 0.0
  %322 = vmatprep.subr.mxu0 0.0
  %323 = vmatpush2.msra.mxu0 0.0
  %324 = vmatprep.subr.mxu0 0.0
  %325 = vmatpush2.msra.mxu0 0.0
  %326 = vmatprep.subr.mxu0 0.0
  %327 = vmatpush2.msra.mxu0 0.0
  %328 = vmatprep.subr.mxu0 0.0
  %329 = vmatpush2.msra.mxu0 0.0
  %330 = vmatprep.mubr.f32.mxu0 0.0
  %331 = vmatmul.mubr.f32.gmra.mxu0 %v260
  %v332 = vpop.f32.mrf.mxu0
  %v333 = vadd.f32 %v257, %v332
  %v334 = vpop.f32.mrf.mxu0
  %335 = vdwg.mxu0
  %v336 = vadd.f32 %v251, %v333
  %v337 = vmax.f32 %v336, 0.0
  %v338 = vlaneseq
  %v339 = vshrl.u32 %v338, 7
  %v340 = vsub.s32 0, %v339
  %v341 = vrot.slane %v33, %v340
  %v342 = vmul.f32 %v337, %v341
  %v343 = vsel %vm227, %v342, 0.0
  %344 = vadd.xlane.f32.xlu0 %v343
  %v345 = vpop.xlane.xlu0 %344
  %v346 = vlaneseq
  %v347 = vshrl.u32 %v346, 7
  %v348 = vsub.s32 0, %v347
  %v349 = vrot.slane %v34, %v348
  %v350 = vadd.f32 %v345, %v349
  %352 = vset.pattern.permute.xlu0 0
  %353 = vperm.xlu0 %352, %v350
  %v354 = vpop.permute.xlu0 %353
  %vm356 = vcmask 64512
  %357 = vst.msk [vmem:[%s7] sm:$0xff] %vm356, %v354
  // Predicated region
  $region30: #{critic_forward.1} parent=0 // pred_check
    _
  $region31: #{critic_forward.1} parent=0 // pred_check_branch
    %359 = sbr.rel (0) target = $region33
  $region32: #{critic_forward.1} parent=0 // pred_region
    _
  $region33: #{critic_forward.1} parent=0 // pred_fallthru
    _
  // Predicated region
  $region34: #{critic_forward.1} parent=0 // pred_check
    _
  $region35: #{critic_forward.1} parent=0 // pred_check_branch
    %361 = sbr.rel (0) target = $region37
  $region36: #{critic_forward.1} parent=0 // pred_region
    _
  $region37: #{critic_forward.1} parent=0 // pred_fallthru
    _

</llo_original>
